<compile_context>
chip_gen: v7x
topology: tpu7x:2x2x1
jax: 0.10.0
libtpu: 0.0.40
codegen_flags: <defaults>
</compile_context>

<pallas_src>
import functools

import numpy as np
import jax
import jax.numpy as jnp
from jax.experimental import pallas as pl
from jax.experimental.pallas import tpu as pltpu

ATTN_DIM = 50   # fixed inner dim of attention1/attention2 in the module
_LANE = 128
_SUBLANE = 8


def _round_up(x, m):
    return ((x + m - 1) // m) * m


def _cdiv(a, b):
    return (a + b - 1) // b


def _vmem_capacity_bytes():
    """Per-TensorCore VMEM capacity; conservative v7x fallback if unknown."""
    try:
        return int(pltpu.get_tpu_info().vmem_capacity_bytes)
    except Exception:
        return 64 * 1024 * 1024


def _vmem_limit_bytes(capacity):
    """Generation-aware scoped VMEM limit: tight on v7x, generous on v5e/v6e."""
    if capacity <= 64 * 1024 * 1024:       # v7x: 64 MiB physical per TC
        return 40 * 1024 * 1024
    return 96 * 1024 * 1024                # v5e / v6e: 128 MiB physical


def _choose_batch_tiling(batch, seq_pad, hidden, itemsize, budget_bytes):
    """Pick (TB, steps, B_pad) so the full per-step VMEM footprint fits
    `budget_bytes`, TB is a multiple of 8, and the grid has >= 2 steps
    (megacore) and ideally >= 4 steps (DMA/compute overlap) when B allows."""
    per_elem = (
        2 * seq_pad * hidden * itemsize                     # input tile, double-buffered
        + seq_pad * _LANE * 4                               # a1 padded to 128 lanes (f32)
        + 3 * _round_up(seq_pad, _LANE) * 4                 # scores/exp/attn lane-padded temps
        + 2 * (_round_up(hidden, _LANE) + _round_up(seq_pad, _LANE)) * 4  # outputs, double-buffered
    )
    weights = 2 * (_round_up(hidden, _SUBLANE) * _LANE + 2 * _SUBLANE * _LANE) * 4
    cap = max(1, (budget_bytes - weights) // max(1, per_elem))
    cap_blocks = max(1, cap // _SUBLANE)        # capacity in 8-row sublane blocks
    n_blocks = _cdiv(batch, _SUBLANE)           # 8-row blocks needed to cover B
    target_steps = min(n_blocks, 4)             # >=2 for megacore, >=4 for overlap
    steps = max(target_steps, _cdiv(n_blocks, cap_blocks))
    tb_blocks = _cdiv(n_blocks, steps)
    tb = tb_blocks * _SUBLANE
    steps = _cdiv(n_blocks, tb_blocks)
    return tb, steps, tb * steps


def _self_attention_kernel(x_ref, w1_ref, b1_ref, w2_ref, dot_ref, attn_ref,
                           *, seq_valid):
    # x_ref:  (TB, S_pad, H)   batch tile (S_pad is a multiple of 8)
    # w1_ref: (H, 50), b1_ref: (1, 50), w2_ref: (1, 50)
    # dot_ref: (TB, H), attn_ref: (TB, S_pad)
    TB, S, H = x_ref.shape

    # attention1: Linear(H -> 50) + tanh — one large-M MXU matmul for the tile.
    # S is padded to a multiple of 8 in the wrapper, so this reshape is a free
    # relayout (no VMEM copy).
    a1 = jnp.tanh(
        jnp.dot(x_ref[...].reshape(TB * S, H), w1_ref[...],
                preferred_element_type=jnp.float32)
        + b1_ref[...]
    )                                                              # (TB*S, 50)

    # attention2: Linear(50 -> 1). N=1 output column -> VPU multiply + lane
    # reduction instead of a degenerate MXU matmul.  b2 is omitted: a constant
    # added before the seq-axis softmax cancels exactly.
    scores = jnp.sum(a1.reshape(TB, S, ATTN_DIM) * w2_ref[...], axis=-1)  # (TB, S)

    if seq_valid < S:  # mask zero-padded sequence positions (static branch)
        pos = jax.lax.broadcasted_iota(jnp.int32, (TB, S), 1)
        scores = jnp.where(pos < seq_valid, scores, -1e30)

    # softmax over the sequence axis, lane-dense (S on the lane axis).
    m = jnp.max(scores, axis=-1, keepdims=True)                    # (TB, 1)
    e = jnp.exp(scores - m)                                        # (TB, S)
    attn = e * pl.reciprocal(jnp.sum(e, axis=-1, keepdims=True), approx=False)

    # lane-dense attention-weight store (f32, matching PyTorch's softmax dtype).
    attn_ref[...] = attn.astype(attn_ref.dtype)

    # weighted sum over sequence: dot[b, :] = sum_s x[b, s, :] * attn[b, s].
    # Re-read x_ref (already VMEM-resident) instead of keeping it live across
    # the matmul/softmax — shorter live ranges, no spills at large TB.
    dot_ref[...] = jnp.sum(x_ref[...] * attn[:, :, None], axis=1).astype(dot_ref.dtype)


def self_attention_pallas(lstm_out, w1, b1, w2):
    """lstm_out: (B, S, H) float32. Returns (dot (B, H), attn (B, S) f32)."""
    B, S, H = lstm_out.shape
    itemsize = lstm_out.dtype.itemsize
    S_pad = _round_up(S, _SUBLANE)

    capacity = _vmem_capacity_bytes()
    vmem_limit = _vmem_limit_bytes(capacity)
    TB, steps, B_pad = _choose_batch_tiling(
        B, S_pad, H, itemsize, budget_bytes=int(0.6 * vmem_limit))

    x = lstm_out
    if B_pad != B or S_pad != S:
        x = jnp.pad(x, ((0, B_pad - B), (0, S_pad - S), (0, 0)))

    b1_2d = b1.reshape(1, ATTN_DIM)
    w2_row = w2.reshape(1, ATTN_DIM)           # (50, 1) -> (1, 50)

    kernel = functools.partial(_self_attention_kernel, seq_valid=S)

    grid_spec = pltpu.PrefetchScalarGridSpec(
        num_scalar_prefetch=0,
        grid=(steps,),
        in_specs=[
            pl.BlockSpec((TB, S_pad, H), lambda b: (b, 0, 0)),   # lstm_out tile
            pl.BlockSpec((H, ATTN_DIM), lambda b: (0, 0)),       # W1
            pl.BlockSpec((1, ATTN_DIM), lambda b: (0, 0)),       # b1
            pl.BlockSpec((1, ATTN_DIM), lambda b: (0, 0)),       # W2 (row form)
        ],
        out_specs=[
            pl.BlockSpec((TB, H), lambda b: (b, 0)),             # dot_product
            pl.BlockSpec((TB, S_pad), lambda b: (b, 0)),         # attention wts
        ],
    )

    dot, attn = pl.pallas_call(
        kernel,
        out_shape=(
            jax.ShapeDtypeStruct((B_pad, H), lstm_out.dtype),
            jax.ShapeDtypeStruct((B_pad, S_pad), jnp.float32),
        ),
        grid_spec=grid_spec,
        compiler_params=pltpu.CompilerParams(
            dimension_semantics=("parallel",),
            vmem_limit_bytes=vmem_limit,
        ),
    )(x, w1, b1_2d, w2_row)

    return dot[:B], attn[:B, :S]


def self_attention_forward(lstm_out, seq_lens, params):
    """Mirror of SelfAttention.forward. `seq_lens` is unused (as in PyTorch)."""
    del seq_lens
    dot, attn = self_attention_pallas(
        lstm_out, params["w1"], params["b1"], params["w2"]
    )
    # PyTorch returns attention_weights with shape (B, S, 1) as numpy.
    return dot, np.asarray(attn)[:, :, None]


def _reference(lstm_out, params):
    a1 = jnp.tanh(lstm_out @ params["w1"] + params["b1"])
    a2 = jax.nn.softmax(a1 @ params["w2"] + params["b2"], axis=1)
    dot = jnp.sum(lstm_out * a2, axis=1)
    return dot, a2


if __name__ == "__main__":
    B, S, H = 2, 8, 32  # batch, seq, hidden_dim

    key = jax.random.PRNGKey(0)
    kx, k1, k2, k3, k4, _ = jax.random.split(key, 6)

    # Deterministic parameter init (PyTorch Linear-style uniform bounds).
    bound1 = 1.0 / np.sqrt(H)
    bound2 = 1.0 / np.sqrt(ATTN_DIM)
    params = {
        "w1": jax.random.uniform(k1, (H, ATTN_DIM), jnp.float32, -bound1, bound1),
        "b1": jax.random.uniform(k2, (ATTN_DIM,), jnp.float32, -bound1, bound1),
        "w2": jax.random.uniform(k3, (ATTN_DIM, 1), jnp.float32, -bound2, bound2),
        "b2": jax.random.uniform(k4, (1,), jnp.float32, -bound2, bound2),
    }

    lstm_out = jax.random.normal(kx, (B, S, H), jnp.float32)
    seq_lens = jnp.full((B,), S, dtype=jnp.int32)  # unused, as in PyTorch forward

    dot, attn_np = self_attention_forward(lstm_out, seq_lens, params)
    dot = jax.block_until_ready(dot)

    # Correctness check against a pure-JAX reference (b2 included in the ref;
    # it cancels inside the softmax, so the kernel omits it).
    ref_dot, ref_attn = _reference(lstm_out, params)
    np.testing.assert_allclose(np.asarray(dot), np.asarray(ref_dot),
                               rtol=1e-5, atol=1e-5)
    np.testing.assert_allclose(attn_np, np.asarray(ref_attn),
                               rtol=1e-5, atol=1e-5)

    print("KERNEL_OK")
</pallas_src>

<mosaic_0001>
module attributes {stable_mosaic.version = 11 : i64} {
  func.func @_self_attention_kernel(%arg0: i32, %arg1: memref<8x8x32xf32, #tpu.memory_space<vmem>>, %arg2: memref<32x50xf32, #tpu.memory_space<vmem>>, %arg3: memref<1x50xf32, #tpu.memory_space<vmem>>, %arg4: memref<1x50xf32, #tpu.memory_space<vmem>>, %arg5: memref<8x32xf32, #tpu.memory_space<vmem>>, %arg6: memref<8x8xf32, #tpu.memory_space<vmem>>) attributes {dimension_semantics = [#tpu.dimension_semantics<parallel>], iteration_bounds = array<i64: 1>, scalar_prefetch = 0 : i64, scratch_operands = 0 : i64, tpu.core_type = #tpu.core_type<tc>, window_params = [{transform_indices = @transform_0, window_bounds = array<i64: 8, 8, 32>}, {pipeline_mode = #tpu.pipeline_mode<synchronous>, transform_indices = @transform_1, window_bounds = array<i64: 32, 50>}, {pipeline_mode = #tpu.pipeline_mode<synchronous>, transform_indices = @transform_2, window_bounds = array<i64: 1, 50>}, {pipeline_mode = #tpu.pipeline_mode<synchronous>, transform_indices = @transform_3, window_bounds = array<i64: 1, 50>}, {transform_indices = @transform_4, window_bounds = array<i64: 8, 32>}, {transform_indices = @transform_5, window_bounds = array<i64: 8, 8>}]} {
    %c0 = arith.constant 0 : index
    %c0_0 = arith.constant 0 : index
    %c0_1 = arith.constant 0 : index
    %0 = vector.load %arg1[%c0, %c0_0, %c0_1] : memref<8x8x32xf32, #tpu.memory_space<vmem>>, vector<8x8x32xf32>
    %1 = vector.shape_cast %0 : vector<8x8x32xf32> to vector<64x32xf32>
    %c0_2 = arith.constant 0 : index
    %c0_3 = arith.constant 0 : index
    %2 = vector.load %arg2[%c0_2, %c0_3] : memref<32x50xf32, #tpu.memory_space<vmem>>, vector<32x50xf32>
    %cst = arith.constant dense<0.000000e+00> : vector<64x50xf32>
    %3 = tpu.matmul %1, %2, %cst {dimension_numbers = #tpu.dot_dimension_numbers<[1], [0], [0], [1], [0, 0, 1, 1], [], []>} : vector<64x32xf32>, vector<32x50xf32>, vector<64x50xf32> -> vector<64x50xf32>
    %c0_4 = arith.constant 0 : index
    %c0_5 = arith.constant 0 : index
    %4 = vector.load %arg3[%c0_4, %c0_5] : memref<1x50xf32, #tpu.memory_space<vmem>>, vector<1x50xf32>
    %5 = vector.broadcast %4 : vector<1x50xf32> to vector<64x50xf32>
    %6 = arith.addf %3, %5 : vector<64x50xf32>
    %7 = math.tanh %6 : vector<64x50xf32>
    %8 = vector.shape_cast %7 : vector<64x50xf32> to vector<8x8x50xf32>
    %c0_6 = arith.constant 0 : index
    %c0_7 = arith.constant 0 : index
    %9 = vector.load %arg4[%c0_6, %c0_7] : memref<1x50xf32, #tpu.memory_space<vmem>>, vector<1x50xf32>
    %10 = vector.shape_cast %9 : vector<1x50xf32> to vector<1x1x50xf32>
    %11 = vector.broadcast %10 : vector<1x1x50xf32> to vector<8x8x50xf32>
    %12 = arith.mulf %8, %11 : vector<8x8x50xf32>
    %cst_8 = arith.constant dense<0.000000e+00> : vector<8x8xf32>
    %13 = vector.multi_reduction <add>, %12, %cst_8 [2] : vector<8x8x50xf32> to vector<8x8xf32>
    %cst_9 = arith.constant dense<0xFF800000> : vector<8xf32>
    %14 = vector.multi_reduction <maximumf>, %13, %cst_9 [1] : vector<8x8xf32> to vector<8xf32>
    %15 = vector.shape_cast %14 : vector<8xf32> to vector<8x1xf32>
    %16 = vector.broadcast %15 : vector<8x1xf32> to vector<8x8xf32>
    %17 = arith.subf %13, %16 : vector<8x8xf32>
    %18 = math.exp %17 : vector<8x8xf32>
    %cst_10 = arith.constant dense<0.000000e+00> : vector<8xf32>
    %19 = vector.multi_reduction <add>, %18, %cst_10 [1] : vector<8x8xf32> to vector<8xf32>
    %20 = vector.shape_cast %19 : vector<8xf32> to vector<8x1xf32>
    %21 = tpu.reciprocal %20 : vector<8x1xf32> -> vector<8x1xf32>
    %22 = vector.broadcast %21 : vector<8x1xf32> to vector<8x8xf32>
    %23 = arith.mulf %18, %22 : vector<8x8xf32>
    %c0_11 = arith.constant 0 : index
    %c0_12 = arith.constant 0 : index
    %24 = vector.load %arg6[%c0_11, %c0_12] : memref<8x8xf32, #tpu.memory_space<vmem>>, vector<8x8xf32>
    tpu.vector_store %arg6[%c0_11, %c0_12], %23 {strides = array<i32>} : memref<8x8xf32, #tpu.memory_space<vmem>>, vector<8x8xf32>,
    %c0_13 = arith.constant 0 : index
    %c0_14 = arith.constant 0 : index
    %c0_15 = arith.constant 0 : index
    %25 = vector.load %arg1[%c0_13, %c0_14, %c0_15] : memref<8x8x32xf32, #tpu.memory_space<vmem>>, vector<8x8x32xf32>
    %26 = vector.shape_cast %23 : vector<8x8xf32> to vector<8x8x1xf32>
    %27 = vector.broadcast %26 : vector<8x8x1xf32> to vector<8x8x32xf32>
    %28 = arith.mulf %25, %27 : vector<8x8x32xf32>
    %cst_16 = arith.constant dense<0.000000e+00> : vector<8x32xf32>
    %29 = vector.multi_reduction <add>, %28, %cst_16 [1] : vector<8x8x32xf32> to vector<8x32xf32>
    %c0_17 = arith.constant 0 : index
    %c0_18 = arith.constant 0 : index
    %30 = vector.load %arg5[%c0_17, %c0_18] : memref<8x32xf32, #tpu.memory_space<vmem>>, vector<8x32xf32>
    tpu.vector_store %arg5[%c0_17, %c0_18], %29 {strides = array<i32>} : memref<8x32xf32, #tpu.memory_space<vmem>>, vector<8x32xf32>,
    return
  }
  func.func @transform_0(%arg0: i32) -> (i32, i32, i32) {
    %c0_i32 = arith.constant 0 : i32
    %c0_i32_0 = arith.constant 0 : i32
    %c0_i32_1 = arith.constant 0 : i32
    return %arg0, %c0_i32, %c0_i32_0 : i32, i32, i32
  }
  func.func @transform_1(%arg0: i32) -> (i32, i32) {
    %c0_i32 = arith.constant 0 : i32
    %c0_i32_0 = arith.constant 0 : i32
    %c0_i32_1 = arith.constant 0 : i32
    return %c0_i32, %c0_i32_0 : i32, i32
  }
  func.func @transform_2(%arg0: i32) -> (i32, i32) {
    %c0_i32 = arith.constant 0 : i32
    %c0_i32_0 = arith.constant 0 : i32
    %c0_i32_1 = arith.constant 0 : i32
    return %c0_i32, %c0_i32_0 : i32, i32
  }
  func.func @transform_3(%arg0: i32) -> (i32, i32) {
    %c0_i32 = arith.constant 0 : i32
    %c0_i32_0 = arith.constant 0 : i32
    %c0_i32_1 = arith.constant 0 : i32
    return %c0_i32, %c0_i32_0 : i32, i32
  }
  func.func @transform_4(%arg0: i32) -> (i32, i32) {
    %c0_i32 = arith.constant 0 : i32
    %c0_i32_0 = arith.constant 0 : i32
    return %arg0, %c0_i32 : i32, i32
  }
  func.func @transform_5(%arg0: i32) -> (i32, i32) {
    %c0_i32 = arith.constant 0 : i32
    %c0_i32_0 = arith.constant 0 : i32
    return %arg0, %c0_i32 : i32, i32
  }
}

</mosaic_0001>

<llo_original>
// kernel: tpu_custom_call.1
$region0: #{tpu_custom_call.1}
  #allocation0 [shape = 'u32[]', space=smem, size = 0x4, offset = 0x4, fixed_abs, tag = 'smem constant byte address 0x4 - core index']
  #allocation1 [shape = 'u32[144,128]{1,0:T(1,128)}', space=vmem, size = 0x12000, scoped, tag = 'internal scratch']
  %s0 = inlined_call_operand.hbm [shape: f32[8,8,32], index: 0, kind: input, shape index: {}]
  %s1 = inlined_call_operand.hbm [shape: f32[32,50], index: 1, kind: input, shape index: {}]
  %s2 = inlined_call_operand.vmem [shape: f32[1,50], index: 2, kind: input, shape index: {}]
  %s3 = inlined_call_operand.vmem [shape: f32[1,50], index: 3, kind: input, shape index: {}]
  %s4 = inlined_call_operand.hbm [shape: f32[8,32], index: 4, kind: output, shape index: {0}]
  %s5 = inlined_call_operand.hbm [shape: f32[8,8], index: 5, kind: output, shape index: {1}]
  %6 = xla_tuple %s4, %s5
  %s7 = sld [smem:[#allocation0]]
  $region42: #{tpu_custom_call.1} parent=0
    _
  %s9 = ssub.s32 1, %s7
  %s10 = scalar_select 0, %s9, %s7
  $region1: #{tpu_custom_call.1} parent=0
    #allocation2 [shape = 'u8[32768]{0}', space=vmem, size = 0x8000, scoped, tag = 'input window, operand 0, single buffered']
    #allocation3 [shape = 's32[1]{0}', space=sflag, size = 0x4, scoped, tag = 'scoped memory for tpu_custom_call.1']
    #allocation4 [shape = 's32[1]{0}', space=sflag, size = 0x4, scoped, tag = 'scoped memory for tpu_custom_call.1']
    #allocation5 [shape = 'u8[16384]{0}', space=vmem, size = 0x4000, scoped, tag = 'input window, operand 1, single buffered']
    #allocation6 [shape = 's32[1]{0}', space=sflag, size = 0x4, scoped, tag = 'scoped memory for tpu_custom_call.1']
    #allocation7 [shape = 'u8[4096]{0}', space=vmem, size = 0x1000, scoped, tag = 'output window, operand 0, single buffered']
    #allocation8 [shape = 'u8[4096]{0}', space=vmem, size = 0x1000, scoped, tag = 'output window, operand 1, single buffered']
    #allocation9 [shape = 's32[1]{0}', space=sflag, size = 0x4, scoped, tag = 'scoped memory for tpu_custom_call.1']
    %11 = vsyncpa [#allocation3], 0
    %12 = vsyncpa [#allocation6], 0
    %13 = vsyncpa [#allocation4], 0
    %14 = vsyncpa [#allocation9], 0
    // Predicated region
    $region2: #{tpu_custom_call.1} parent=1 // pred_check
      _
    $region3: #{tpu_custom_call.1} parent=1 // pred_check_branch
      %16 = sbr.rel (0) target = $region5
    $region4: #{tpu_custom_call.1} parent=1 // pred_region
      %s18 = ssub.s32 1024, 1024
      %19 = vsyncadd [#allocation3], %s18
      %s20 = sshll.u32 [#allocation2], 4
      %s21 = int_to_ptr.vmem [resolvable:$true] %s20
      %26 = dma.hbm_to_vmem [thread:$0]  %s0, 1024, %s21, [#allocation3], 128, 128, 8
    $region5: #{tpu_custom_call.1} parent=1 // pred_fallthru
      _
    // Predicated region
    $region6: #{tpu_custom_call.1} parent=1 // pred_check
      _
    $region7: #{tpu_custom_call.1} parent=1 // pred_check_branch
      %28 = sbr.rel (0) target = $region9
    $region8: #{tpu_custom_call.1} parent=1 // pred_region
      %s30 = ssub.s32 512, 512
      %31 = vsyncadd [#allocation6], %s30
      %s32 = sshll.u32 [#allocation5], 4
      %s33 = int_to_ptr.vmem [resolvable:$true] %s32
      %38 = dma.hbm_to_vmem [thread:$0]  %s1, 512, %s33, [#allocation6], 128, 128, 8
    $region9: #{tpu_custom_call.1} parent=1 // pred_fallthru
      _
    // Predicated region
    $region10: #{tpu_custom_call.1} parent=1 // pred_check
      _
    $region11: #{tpu_custom_call.1} parent=1 // pred_check_branch
      %40 = sbr.rel (0) target = $region13
    $region12: #{tpu_custom_call.1} parent=1 // pred_region
      _
    $region13: #{tpu_custom_call.1} parent=1 // pred_fallthru
      _
    // Predicated region
    $region14: #{tpu_custom_call.1} parent=1 // pred_check
      _
    $region15: #{tpu_custom_call.1} parent=1 // pred_check_branch
      %42 = sbr.rel (0) target = $region17
    $region16: #{tpu_custom_call.1} parent=1 // pred_region
      _
    $region17: #{tpu_custom_call.1} parent=1 // pred_fallthru
      _
    // Predicated region
    $region18: #{tpu_custom_call.1} parent=1 // pred_check
      _
    $region19: #{tpu_custom_call.1} parent=1 // pred_check_branch
      %44 = sbr.rel (0) target = $region21
    $region20: #{tpu_custom_call.1} parent=1 // pred_region
      %45 = dma.done [#allocation3], 1024
    $region21: #{tpu_custom_call.1} parent=1 // pred_fallthru
      _
    // Predicated region
    $region22: #{tpu_custom_call.1} parent=1 // pred_check
      _
    $region23: #{tpu_custom_call.1} parent=1 // pred_check_branch
      %47 = sbr.rel (0) target = $region25
    $region24: #{tpu_custom_call.1} parent=1 // pred_region
      %48 = dma.done [#allocation6], 512
    $region25: #{tpu_custom_call.1} parent=1 // pred_fallthru
      _
    %v49 = vld [vmem:[#allocation2] sm:$0xff]
    %v50 = vld [vmem:[#allocation2 + $0x8] sm:$0xff]
    %v51 = vld [vmem:[#allocation2 + $0x10] sm:$0xff]
    %v52 = vld [vmem:[#allocation2 + $0x18] sm:$0xff]
    %v53 = vld [vmem:[#allocation2 + $0x20] sm:$0xff]
    %v54 = vld [vmem:[#allocation2 + $0x28] sm:$0xff]
    %v55 = vld [vmem:[#allocation2 + $0x30] sm:$0xff]
    %v56 = vld [vmem:[#allocation2 + $0x38] sm:$0xff]
    %v57 = vld [vmem:[#allocation5] sm:$0xff]
    %v58 = vld [vmem:[#allocation5 + $0x8] sm:$0xff]
    %v59 = vld [vmem:[#allocation5 + $0x10] sm:$0xff]
    %v60 = vld [vmem:[#allocation5 + $0x18] sm:$0xff]
    %v61 = vld [vmem:[%s2] sm:$0x1]
    %v63 = vlaneseq
    %v64 = vshrl.u32 %v63, 7
    %v65 = vsub.s32 0, %v64
    %v66 = vrot.slane %v61, %v65
    %vm68 = vcmask 261120
    %v70 = vsel %vm68, %v49, 0
    %v73 = vsel %vm68, %v50, 0
    %v76 = vsel %vm68, %v51, 0
    %v79 = vsel %vm68, %v52, 0
    %v82 = vsel %vm68, %v53, 0
    %v85 = vsel %vm68, %v54, 0
    %v88 = vsel %vm68, %v55, 0
    %v91 = vsel %vm68, %v56, 0
    %93 = vmatprep.subr.mxu0 0.0
    %94 = vmatpush1.msra.mxu0 %v57
    %95 = vmatprep.subr.mxu0 0.0
    %96 = vmatpush1.msra.mxu0 %v58
    %97 = vmatprep.subr.mxu0 0.0
    %98 = vmatpush1.msra.mxu0 %v59
    %99 = vmatprep.subr.mxu0 0.0
    %100 = vmatpush1.msra.mxu0 %v60
    %101 = vmatprep.subr.mxu0 0.0
    %102 = vmatpush1.msra.mxu0 0.0
    %103 = vmatprep.subr.mxu0 0.0
    %104 = vmatpush1.msra.mxu0 0.0
    %105 = vmatprep.subr.mxu0 0.0
    %106 = vmatpush1.msra.mxu0 0.0
    %107 = vmatprep.subr.mxu0 0.0
    %108 = vmatpush1.msra.mxu0 0.0
    %109 = vmatprep.subr.mxu0 0.0
    %110 = vmatpush1.msra.mxu0 0.0
    %111 = vmatprep.subr.mxu0 0.0
    %112 = vmatpush1.msra.mxu0 0.0
    %113 = vmatprep.subr.mxu0 0.0
    %114 = vmatpush1.msra.mxu0 0.0
    %115 = vmatprep.subr.mxu0 0.0
    %116 = vmatpush1.msra.mxu0 0.0
    %117 = vmatprep.subr.mxu0 0.0
    %118 = vmatpush1.msra.mxu0 0.0
    %119 = vmatprep.subr.mxu0 0.0
    %120 = vmatpush1.msra.mxu0 0.0
    %121 = vmatprep.subr.mxu0 0.0
    %122 = vmatpush1.msra.mxu0 0.0
    %123 = vmatprep.subr.mxu0 0.0
    %124 = vmatpush1.msra.mxu0 0.0
    %125 = vmatprep.subr.mxu0 0.0
    %126 = vmatpush1.msra.mxu0 0.0
    %127 = vmatprep.subr.mxu0 0.0
    %128 = vmatpush1.msra.mxu0 0.0
    %129 = vmatprep.subr.mxu0 0.0
    %130 = vmatpush1.msra.mxu0 0.0
    %131 = vmatprep.subr.mxu0 0.0
    %132 = vmatpush1.msra.mxu0 0.0
    %133 = vmatprep.subr.mxu0 0.0
    %134 = vmatpush1.msra.mxu0 0.0
    %135 = vmatprep.subr.mxu0 0.0
    %136 = vmatpush1.msra.mxu0 0.0
    %137 = vmatprep.subr.mxu0 0.0
    %138 = vmatpush1.msra.mxu0 0.0
    %139 = vmatprep.subr.mxu0 0.0
    %140 = vmatpush1.msra.mxu0 0.0
    %141 = vmatprep.subr.mxu0 0.0
    %142 = vmatpush1.msra.mxu0 0.0
    %143 = vmatprep.subr.mxu0 0.0
    %144 = vmatpush1.msra.mxu0 0.0
    %145 = vmatprep.subr.mxu0 0.0
    %146 = vmatpush1.msra.mxu0 0.0
    %147 = vmatprep.subr.mxu0 0.0
    %148 = vmatpush1.msra.mxu0 0.0
    %149 = vmatprep.subr.mxu0 0.0
    %150 = vmatpush1.msra.mxu0 0.0
    %151 = vmatprep.subr.mxu0 0.0
    %152 = vmatpush1.msra.mxu0 0.0
    %153 = vmatprep.subr.mxu0 0.0
    %154 = vmatpush1.msra.mxu0 0.0
    %155 = vmatprep.subr.mxu0 0.0
    %156 = vmatpush1.msra.mxu0 0.0
    %157 = vmatprep.mubr.f32.mxu0 0.0
    %158 = vmatmul.mubr.f32.gmra.mrb[0].mxu0 %v70
    %v159 = vpop.f32.mrb[0].mxu0
    %v160 = vadd.f32 %v66, %v159
    %v161 = vpop.f32.mrb[0].mxu0
    %162 = vmatprep.mubr.f32.mxu0 0.0
    %163 = vmatmul.mubr.f32.gmra.mrb[0].mxu0 %v73
    %v164 = vpop.f32.mrb[0].mxu0
    %v165 = vadd.f32 %v66, %v164
    %v166 = vpop.f32.mrb[0].mxu0
    %167 = vmatprep.mubr.f32.mxu0 0.0
    %168 = vmatmul.mubr.f32.gmra.mrb[0].mxu0 %v76
    %v169 = vpop.f32.mrb[0].mxu0
    %v170 = vadd.f32 %v66, %v169
    %v171 = vpop.f32.mrb[0].mxu0
    %172 = vmatprep.mubr.f32.mxu0 0.0
    %173 = vmatmul.mubr.f32.gmra.mrb[0].mxu0 %v79
    %v174 = vpop.f32.mrb[0].mxu0
    %v175 = vadd.f32 %v66, %v174
    %v176 = vpop.f32.mrb[0].mxu0
    %177 = vmatprep.mubr.f32.mxu0 0.0
    %178 = vmatmul.mubr.f32.gmra.mrb[0].mxu0 %v82
    %v179 = vpop.f32.mrb[0].mxu0
    %v180 = vadd.f32 %v66, %v179
    %v181 = vpop.f32.mrb[0].mxu0
    %182 = vmatprep.mubr.f32.mxu0 0.0
    %183 = vmatmul.mubr.f32.gmra.mrb[0].mxu0 %v85
    %v184 = vpop.f32.mrb[0].mxu0
    %v185 = vadd.f32 %v66, %v184
    %v186 = vpop.f32.mrb[0].mxu0
    %187 = vmatprep.mubr.f32.mxu0 0.0
    %188 = vmatmul.mubr.f32.gmra.mrb[0].mxu0 %v88
    %v189 = vpop.f32.mrb[0].mxu0
    %v190 = vadd.f32 %v66, %v189
    %v191 = vpop.f32.mrb[0].mxu0
    %192 = vmatprep.mubr.f32.mxu0 0.0
    %193 = vmatmul.mubr.f32.gmra.mrb[0].mxu0 %v91
    %v194 = vpop.f32.mrb[0].mxu0
    %v195 = vadd.f32 %v66, %v194
    %v196 = vpop.f32.mrb[0].mxu0
    %197 = vdwg.mxu0
    %v198 = vtanh.pop %v160
    %v199 = vtanh.pop %v165
    %v200 = vtanh.pop %v170
    %v201 = vtanh.pop %v175
    %v202 = vtanh.pop %v180
    %v203 = vtanh.pop %v185
    %v204 = vtanh.pop %v190
    %v205 = vtanh.pop %v195
    %v206 = vld [vmem:[%s3] sm:$0x1]
    %v208 = vlaneseq
    %v209 = vshrl.u32 %v208, 7
    %v210 = vsub.s32 0, %v209
    %v211 = vrot.slane %v206, %v210
    %v213 = vmul.f32 %v198, %v211
    %v214 = vmul.f32 %v199, %v211
    %v215 = vmul.f32 %v200, %v211
    %v216 = vmul.f32 %v201, %v211
    %v217 = vmul.f32 %v202, %v211
    %v218 = vmul.f32 %v203, %v211
    %v219 = vmul.f32 %v204, %v211
    %v220 = vmul.f32 %v205, %v211
    %vm221 = vcmask 408576
    %v222 = vsel %vm221, %v213, 0.0
    %223 = vadd.xlane.f32.xlu0 %v222
    %v224 = vpop.xlane.xlu0 %223
    %v225 = vsel %vm221, %v214, 0.0
    %226 = vadd.xlane.f32.xlu0 %v225
    %v227 = vpop.xlane.xlu0 %226
    %v228 = vsel %vm221, %v215, 0.0
    %229 = vadd.xlane.f32.xlu0 %v228
    %v230 = vpop.xlane.xlu0 %229
    %v231 = vsel %vm221, %v216, 0.0
    %232 = vadd.xlane.f32.xlu0 %v231
    %v233 = vpop.xlane.xlu0 %232
    %v234 = vsel %vm221, %v217, 0.0
    %235 = vadd.xlane.f32.xlu0 %v234
    %v236 = vpop.xlane.xlu0 %235
    %v237 = vsel %vm221, %v218, 0.0
    %238 = vadd.xlane.f32.xlu0 %v237
    %v239 = vpop.xlane.xlu0 %238
    %v240 = vsel %vm221, %v219, 0.0
    %241 = vadd.xlane.f32.xlu0 %v240
    %v242 = vpop.xlane.xlu0 %241
    %v243 = vsel %vm221, %v220, 0.0
    %244 = vadd.xlane.f32.xlu0 %v243
    %v245 = vpop.xlane.xlu0 %244
    %v254 = vlaneseq
    %v255 = vand.u32 %v254, 127
    %v256 = vlaneseq
    %v257 = vshrl.u32 %v256, 7
    %v258 = vsub.s32 %v255, %v257
    %v259 = vrot.slane %v224, %v258
    %v260 = vlaneseq
    %v261 = vshrl.u32 %v260, 7
    %v262 = vsub.s32 %v255, %v261
    %v263 = vrot.slane %v227, %v262
    %v264 = vlaneseq
    %v265 = vshrl.u32 %v264, 7
    %v266 = vsub.s32 %v255, %v265
    %v267 = vrot.slane %v230, %v266
    %v268 = vlaneseq
    %v269 = vshrl.u32 %v268, 7
    %v270 = vsub.s32 %v255, %v269
    %v271 = vrot.slane %v233, %v270
    %v272 = vlaneseq
    %v273 = vshrl.u32 %v272, 7
    %v274 = vsub.s32 %v255, %v273
    %v275 = vrot.slane %v236, %v274
    %v276 = vlaneseq
    %v277 = vshrl.u32 %v276, 7
    %v278 = vsub.s32 %v255, %v277
    %v279 = vrot.slane %v239, %v278
    %v280 = vlaneseq
    %v281 = vshrl.u32 %v280, 7
    %v282 = vsub.s32 %v255, %v281
    %v283 = vrot.slane %v242, %v282
    %v284 = vlaneseq
    %v285 = vshrl.u32 %v284, 7
    %v286 = vsub.s32 %v255, %v285
    %v287 = vrot.slane %v245, %v286
    %vm288 = vcmask 1041409
    %v289 = vsel %vm288, %v263, %v259
    %vm290 = vcmask 1042434
    %v291 = vsel %vm290, %v267, %v289
    %vm292 = vcmask 1043459
    %v293 = vsel %vm292, %v271, %v291
    %vm294 = vcmask 1044484
    %v295 = vsel %vm294, %v275, %v293
    %vm296 = vcmask 1045509
    %v297 = vsel %vm296, %v279, %v295
    %vm298 = vcmask 1046534
    %v299 = vsel %vm298, %v283, %v297
    %vm300 = vcmask 1047559
    %v301 = vsel %vm300, %v287, %v299
    %vm303 = vcmask 64512
    %v304 = vsel %vm303, %v301, -inf
    %305 = vmax.xlane.f32.xlu0 %v304
    %v306 = vpop.xlane.xlu0 %305
    %v308 = vlaneseq
    %v309 = vshrl.u32 %v308, 7
    %v310 = vsub.s32 0, %v309
    %v311 = vrot.slane %v306, %v310
    %v312 = vlaneseq
    %v313 = vshrl.u32 %v312, 7
    %v314 = vsub.s32 1, %v313
    %v315 = vrot.slane %v306, %v314
    %v316 = vlaneseq
    %v317 = vshrl.u32 %v316, 7
    %v318 = vsub.s32 2, %v317
    %v319 = vrot.slane %v306, %v318
    %v320 = vlaneseq
    %v321 = vshrl.u32 %v320, 7
    %v322 = vsub.s32 3, %v321
    %v323 = vrot.slane %v306, %v322
    %v324 = vlaneseq
    %v325 = vshrl.u32 %v324, 7
    %v326 = vsub.s32 4, %v325
    %v327 = vrot.slane %v306, %v326
    %v328 = vlaneseq
    %v329 = vshrl.u32 %v328, 7
    %v330 = vsub.s32 5, %v329
    %v331 = vrot.slane %v306, %v330
    %v332 = vlaneseq
    %v333 = vshrl.u32 %v332, 7
    %v334 = vsub.s32 6, %v333
    %v335 = vrot.slane %v306, %v334
    %v336 = vlaneseq
    %v337 = vshrl.u32 %v336, 7
    %v338 = vsub.s32 7, %v337
    %v339 = vrot.slane %v306, %v338
    %v348 = vsub.f32 %v224, %v311
    %v349 = vsub.f32 %v227, %v315
    %v350 = vsub.f32 %v230, %v319
    %v351 = vsub.f32 %v233, %v323
    %v352 = vsub.f32 %v236, %v327
    %v353 = vsub.f32 %v239, %v331
    %v354 = vsub.f32 %v242, %v335
    %v355 = vsub.f32 %v245, %v339
    %v356 = vmul.f32 %v348, 1.442695
    %v357 = vpow.pop %v356
    %v358 = vmul.f32 %v349, 1.442695
    %v359 = vpow.pop %v358
    %v360 = vmul.f32 %v350, 1.442695
    %v361 = vpow.pop %v360
    %v362 = vmul.f32 %v351, 1.442695
    %v363 = vpow.pop %v362
    %v364 = vmul.f32 %v352, 1.442695
    %v365 = vpow.pop %v364
    %v366 = vmul.f32 %v353, 1.442695
    %v367 = vpow.pop %v366
    %v368 = vmul.f32 %v354, 1.442695
    %v369 = vpow.pop %v368
    %v370 = vmul.f32 %v355, 1.442695
    %v371 = vpow.pop %v370
    %380 = vset.pattern.permute.xlu0 0
    %381 = vperm.xlu0 %380, %v357
    %v382 = vpop.permute.xlu0 %381
    %383 = vset.pattern.permute.xlu0 0
    %384 = vperm.xlu0 %383, %v359
    %v385 = vpop.permute.xlu0 %384
    %386 = vset.pattern.permute.xlu0 0
    %387 = vperm.xlu0 %386, %v361
    %v388 = vpop.permute.xlu0 %387
    %389 = vset.pattern.permute.xlu0 0
    %390 = vperm.xlu0 %389, %v363
    %v391 = vpop.permute.xlu0 %390
    %392 = vset.pattern.permute.xlu0 0
    %393 = vperm.xlu0 %392, %v365
    %v394 = vpop.permute.xlu0 %393
    %395 = vset.pattern.permute.xlu0 0
    %396 = vperm.xlu0 %395, %v367
    %v397 = vpop.permute.xlu0 %396
    %398 = vset.pattern.permute.xlu0 0
    %399 = vperm.xlu0 %398, %v369
    %v400 = vpop.permute.xlu0 %399
    %401 = vset.pattern.permute.xlu0 0
    %402 = vperm.xlu0 %401, %v371
    %v403 = vpop.permute.xlu0 %402
    %v404 = vlaneseq
    %v405 = vshrl.u32 %v404, 7
    %v406 = vsub.s32 %v255, %v405
    %v407 = vrot.slane %v382, %v406
    %v408 = vlaneseq
    %v409 = vshrl.u32 %v408, 7
    %v410 = vsub.s32 %v255, %v409
    %v411 = vrot.slane %v385, %v410
    %v412 = vlaneseq
    %v413 = vshrl.u32 %v412, 7
    %v414 = vsub.s32 %v255, %v413
    %v415 = vrot.slane %v388, %v414
    %v416 = vlaneseq
    %v417 = vshrl.u32 %v416, 7
    %v418 = vsub.s32 %v255, %v417
    %v419 = vrot.slane %v391, %v418
    %v420 = vlaneseq
    %v421 = vshrl.u32 %v420, 7
    %v422 = vsub.s32 %v255, %v421
    %v423 = vrot.slane %v394, %v422
    %v424 = vlaneseq
    %v425 = vshrl.u32 %v424, 7
    %v426 = vsub.s32 %v255, %v425
    %v427 = vrot.slane %v397, %v426
    %v428 = vlaneseq
    %v429 = vshrl.u32 %v428, 7
    %v430 = vsub.s32 %v255, %v429
    %v431 = vrot.slane %v400, %v430
    %v432 = vlaneseq
    %v433 = vshrl.u32 %v432, 7
    %v434 = vsub.s32 %v255, %v433
    %v435 = vrot.slane %v403, %v434
    %v436 = vsel %vm288, %v411, %v407
    %v437 = vsel %vm290, %v415, %v436
    %v438 = vsel %vm292, %v419, %v437
    %v439 = vsel %vm294, %v423, %v438
    %v440 = vsel %vm296, %v427, %v439
    %v441 = vsel %vm298, %v431, %v440
    %v442 = vsel %vm300, %v435, %v441
    %v444 = vsel %vm303, %v442, 0.0
    %445 = vadd.xlane.f32.xlu0 %v444
    %v446 = vpop.xlane.xlu0 %445
    %v447 = vrcp.pop %v446
    %v449 = vlaneseq
    %v450 = vshrl.u32 %v449, 7
    %v451 = vsub.s32 0, %v450
    %v452 = vrot.slane %v447, %v451
    %v453 = vlaneseq
    %v454 = vshrl.u32 %v453, 7
    %v455 = vsub.s32 1, %v454
    %v456 = vrot.slane %v447, %v455
    %v457 = vlaneseq
    %v458 = vshrl.u32 %v457, 7
    %v459 = vsub.s32 2, %v458
    %v460 = vrot.slane %v447, %v459
    %v461 = vlaneseq
    %v462 = vshrl.u32 %v461, 7
    %v463 = vsub.s32 3, %v462
    %v464 = vrot.slane %v447, %v463
    %v465 = vlaneseq
    %v466 = vshrl.u32 %v465, 7
    %v467 = vsub.s32 4, %v466
    %v468 = vrot.slane %v447, %v467
    %v469 = vlaneseq
    %v470 = vshrl.u32 %v469, 7
    %v471 = vsub.s32 5, %v470
    %v472 = vrot.slane %v447, %v471
    %v473 = vlaneseq
    %v474 = vshrl.u32 %v473, 7
    %v475 = vsub.s32 6, %v474
    %v476 = vrot.slane %v447, %v475
    %v477 = vlaneseq
    %v478 = vshrl.u32 %v477, 7
    %v479 = vsub.s32 7, %v478
    %v480 = vrot.slane %v447, %v479
    %v489 = vmul.f32 %v357, %v452
    %v490 = vmul.f32 %v359, %v456
    %v491 = vmul.f32 %v361, %v460
    %v492 = vmul.f32 %v363, %v464
    %v493 = vmul.f32 %v365, %v468
    %v494 = vmul.f32 %v367, %v472
    %v495 = vmul.f32 %v369, %v476
    %v496 = vmul.f32 %v371, %v480
    %505 = vset.pattern.permute.xlu0 0
    %506 = vperm.xlu0 %505, %v489
    %v507 = vpop.permute.xlu0 %506
    %508 = vset.pattern.permute.xlu0 0
    %509 = vperm.xlu0 %508, %v490
    %v510 = vpop.permute.xlu0 %509
    %511 = vset.pattern.permute.xlu0 0
    %512 = vperm.xlu0 %511, %v491
    %v513 = vpop.permute.xlu0 %512
    %514 = vset.pattern.permute.xlu0 0
    %515 = vperm.xlu0 %514, %v492
    %v516 = vpop.permute.xlu0 %515
    %517 = vset.pattern.permute.xlu0 0
    %518 = vperm.xlu0 %517, %v493
    %v519 = vpop.permute.xlu0 %518
    %520 = vset.pattern.permute.xlu0 0
    %521 = vperm.xlu0 %520, %v494
    %v522 = vpop.permute.xlu0 %521
    %523 = vset.pattern.permute.xlu0 0
    %524 = vperm.xlu0 %523, %v495
    %v525 = vpop.permute.xlu0 %524
    %526 = vset.pattern.permute.xlu0 0
    %527 = vperm.xlu0 %526, %v496
    %v528 = vpop.permute.xlu0 %527
    %v529 = vlaneseq
    %v530 = vshrl.u32 %v529, 7
    %v531 = vsub.s32 %v255, %v530
    %v532 = vrot.slane %v507, %v531
    %v533 = vlaneseq
    %v534 = vshrl.u32 %v533, 7
    %v535 = vsub.s32 %v255, %v534
    %v536 = vrot.slane %v510, %v535
    %v537 = vlaneseq
    %v538 = vshrl.u32 %v537, 7
    %v539 = vsub.s32 %v255, %v538
    %v540 = vrot.slane %v513, %v539
    %v541 = vlaneseq
    %v542 = vshrl.u32 %v541, 7
    %v543 = vsub.s32 %v255, %v542
    %v544 = vrot.slane %v516, %v543
    %v545 = vlaneseq
    %v546 = vshrl.u32 %v545, 7
    %v547 = vsub.s32 %v255, %v546
    %v548 = vrot.slane %v519, %v547
    %v549 = vlaneseq
    %v550 = vshrl.u32 %v549, 7
    %v551 = vsub.s32 %v255, %v550
    %v552 = vrot.slane %v522, %v551
    %v553 = vlaneseq
    %v554 = vshrl.u32 %v553, 7
    %v555 = vsub.s32 %v255, %v554
    %v556 = vrot.slane %v525, %v555
    %v557 = vlaneseq
    %v558 = vshrl.u32 %v557, 7
    %v559 = vsub.s32 %v255, %v558
    %v560 = vrot.slane %v528, %v559
    %v561 = vsel %vm288, %v536, %v532
    %v562 = vsel %vm290, %v540, %v561
    %v563 = vsel %vm292, %v544, %v562
    %v564 = vsel %vm294, %v548, %v563
    %v565 = vsel %vm296, %v552, %v564
    %v566 = vsel %vm298, %v556, %v565
    %v567 = vsel %vm300, %v560, %v566
    %569 = vst.msk [vmem:[#allocation8] sm:$0xff] %vm303, %v567
    %v570 = vld [vmem:[#allocation2] sm:$0xff]
    %v571 = vld [vmem:[#allocation2 + $0x8] sm:$0xff]
    %v572 = vld [vmem:[#allocation2 + $0x10] sm:$0xff]
    %v573 = vld [vmem:[#allocation2 + $0x18] sm:$0xff]
    %v574 = vld [vmem:[#allocation2 + $0x20] sm:$0xff]
    %v575 = vld [vmem:[#allocation2 + $0x28] sm:$0xff]
    %v576 = vld [vmem:[#allocation2 + $0x30] sm:$0xff]
    %v577 = vld [vmem:[#allocation2 + $0x38] sm:$0xff]
    %v586 = vmul.f32 %v570, %v507
    %v587 = vmul.f32 %v571, %v510
    %v588 = vmul.f32 %v572, %v513
    %v589 = vmul.f32 %v573, %v516
    %v590 = vmul.f32 %v574, %v519
    %v591 = vmul.f32 %v575, %v522
    %v592 = vmul.f32 %v576, %v525
    %v593 = vmul.f32 %v577, %v528
    %v594 = vsel %vm68, %v586, 0.0
    %v595 = vrot.slane %v594, 4
    %v596 = vadd.f32 %v594, %v595
    %v597 = vrot.slane %v596, 2
    %v598 = vadd.f32 %v596, %v597
    %v599 = vrot.slane %v598, 1
    %v600 = vadd.f32 %v598, %v599
    %v601 = vsel %vm68, %v587, 0.0
    %v602 = vrot.slane %v601, 4
    %v603 = vadd.f32 %v601, %v602
    %v604 = vrot.slane %v603, 2
    %v605 = vadd.f32 %v603, %v604
    %v606 = vrot.slane %v605, 1
    %v607 = vadd.f32 %v605, %v606
    %v608 = vsel %vm68, %v588, 0.0
    %v609 = vrot.slane %v608, 4
    %v610 = vadd.f32 %v608, %v609
    %v611 = vrot.slane %v610, 2
    %v612 = vadd.f32 %v610, %v611
    %v613 = vrot.slane %v612, 1
    %v614 = vadd.f32 %v612, %v613
    %v615 = vsel %vm68, %v589, 0.0
    %v616 = vrot.slane %v615, 4
    %v617 = vadd.f32 %v615, %v616
    %v618 = vrot.slane %v617, 2
    %v619 = vadd.f32 %v617, %v618
    %v620 = vrot.slane %v619, 1
    %v621 = vadd.f32 %v619, %v620
    %v622 = vsel %vm68, %v590, 0.0
    %v623 = vrot.slane %v622, 4
    %v624 = vadd.f32 %v622, %v623
    %v625 = vrot.slane %v624, 2
    %v626 = vadd.f32 %v624, %v625
    %v627 = vrot.slane %v626, 1
    %v628 = vadd.f32 %v626, %v627
    %v629 = vsel %vm68, %v591, 0.0
    %v630 = vrot.slane %v629, 4
    %v631 = vadd.f32 %v629, %v630
    %v632 = vrot.slane %v631, 2
    %v633 = vadd.f32 %v631, %v632
    %v634 = vrot.slane %v633, 1
    %v635 = vadd.f32 %v633, %v634
    %v636 = vsel %vm68, %v592, 0.0
    %v637 = vrot.slane %v636, 4
    %v638 = vadd.f32 %v636, %v637
    %v639 = vrot.slane %v638, 2
    %v640 = vadd.f32 %v638, %v639
    %v641 = vrot.slane %v640, 1
    %v642 = vadd.f32 %v640, %v641
    %v643 = vsel %vm68, %v593, 0.0
    %v644 = vrot.slane %v643, 4
    %v645 = vadd.f32 %v643, %v644
    %v646 = vrot.slane %v645, 2
    %v647 = vadd.f32 %v645, %v646
    %v648 = vrot.slane %v647, 1
    %v649 = vadd.f32 %v647, %v648
    %v658 = vsel %vm288, %v607, %v600
    %v659 = vsel %vm290, %v614, %v658
    %v660 = vsel %vm292, %v621, %v659
    %v661 = vsel %vm294, %v628, %v660
    %v662 = vsel %vm296, %v635, %v661
    %v663 = vsel %vm298, %v642, %v662
    %v664 = vsel %vm300, %v649, %v663
    %666 = vst.msk [vmem:[#allocation7] sm:$0xff] %vm68, %v664
    // Predicated region
    $region26: #{tpu_custom_call.1} parent=1 // pred_check
      _
    $region27: #{tpu_custom_call.1} parent=1 // pred_check_branch
      %668 = sbr.rel (0) target = $region29
    $region28: #{tpu_custom_call.1} parent=1 // pred_region
      %s670 = ssub.s32 128, 128
      %671 = vsyncadd [#allocation4], %s670
      %s673 = sshll.u32 [#allocation7], 4
      %s674 = int_to_ptr.vmem [resolvable:$true] %s673
      %676 = dma.vmem_to_hbm [thread:$0]  %s674, 128, %s4, [#allocation4]
    $region29: #{tpu_custom_call.1} parent=1 // pred_fallthru
      _
    // Predicated region
    $region30: #{tpu_custom_call.1} parent=1 // pred_check
      _
    $region31: #{tpu_custom_call.1} parent=1 // pred_check_branch
      %678 = sbr.rel (0) target = $region33
    $region32: #{tpu_custom_call.1} parent=1 // pred_region
      %s680 = ssub.s32 128, 128
      %681 = vsyncadd [#allocation9], %s680
      %s683 = sshll.u32 [#allocation8], 4
      %s684 = int_to_ptr.vmem [resolvable:$true] %s683
      %686 = dma.vmem_to_hbm [thread:$0]  %s684, 128, %s5, [#allocation9]
    $region33: #{tpu_custom_call.1} parent=1 // pred_fallthru
      _
    // Predicated region
    $region34: #{tpu_custom_call.1} parent=1 // pred_check
      _
    $region35: #{tpu_custom_call.1} parent=1 // pred_check_branch
      %688 = sbr.rel (0) target = $region37
    $region36: #{tpu_custom_call.1} parent=1 // pred_region
      %689 = dma.done [#allocation4], 128
    $region37: #{tpu_custom_call.1} parent=1 // pred_fallthru
      _
    // Predicated region
    $region38: #{tpu_custom_call.1} parent=1 // pred_check
      _
    $region39: #{tpu_custom_call.1} parent=1 // pred_check_branch
      %691 = sbr.rel (0) target = $region41
    $region40: #{tpu_custom_call.1} parent=1 // pred_region
      %692 = dma.done [#allocation9], 128
    $region41: #{tpu_custom_call.1} parent=1 // pred_fallthru
      _
    %693 = vsyncpa [#allocation3], 1
    %694 = vsyncpa [#allocation6], 1
    %695 = vsyncpa [#allocation4], 1
    %696 = vsyncpa [#allocation9], 1

</llo_original>
